<compile_context>
chip_gen: v5e
topology: v5e:2x2
jax: 0.10.0
libtpu: 0.0.40
codegen_flags: <defaults>
</compile_context>

<pallas_src>
import functools

import jax
import jax.numpy as jnp
from jax.experimental import pallas as pl
from jax.experimental.pallas import tpu as pltpu

MARGIN = 1.0
EPS = 1e-6  # PyTorch PairwiseDistance default eps (added to the difference)


def _make_kernel(n_total, tile_n, margin, inv_n):
    """Builds the gridded contrastive-loss kernel (closes over static config)."""
    needs_mask = (n_total % tile_n) != 0

    def kernel(x1_ref, x2_ref, t_ref, out_ref):
        i = pl.program_id(0)
        num_tiles = pl.num_programs(0)

        @pl.when(i == 0)
        def _init():
            out_ref[...] = jnp.zeros_like(out_ref)

        x1 = x1_ref[...].astype(jnp.float32)
        x2 = x2_ref[...].astype(jnp.float32)
        t = t_ref[...].astype(jnp.float32)

        diff = x1 - x2 + EPS
        sq_dist = jnp.sum(diff * diff, axis=-1, keepdims=True)      # (tile_n, 1) == d^2
        dist = jnp.sqrt(sq_dist)                                    # (tile_n, 1) == d
        hinge = jnp.maximum(margin - dist, 0.0)
        # (1 - t) * d^2 + t * hinge^2  ==  d^2 + t * (hinge^2 - d^2)
        per_example = sq_dist + t * (hinge * hinge - sq_dist)       # (tile_n, 1)

        if needs_mask:
            row = i * tile_n + jax.lax.broadcasted_iota(jnp.int32, (tile_n, 1), 0)
            per_example = jnp.where(row < n_total, per_example, 0.0)

        out_ref[...] += jnp.sum(per_example, axis=(0, 1), keepdims=True)   # (1, 1)

        @pl.when(i == num_tiles - 1)
        def _finalize():
            out_ref[...] = out_ref[...] * inv_n

    return kernel


def _choose_tile_n(n, d, itemsize, vmem_budget_bytes):
    """Largest multiple-of-8 batch tile s.t. 2 inputs x 2 pipeline buffers fit the budget."""
    d_pad = max(128, ((d + 127) // 128) * 128)        # VMEM minor-dim padding to 128 lanes
    per_row_bytes = 4 * d_pad * max(itemsize, 2)      # 2 inputs x 2 pipeline buffers
    tile = max(8, (vmem_budget_bytes // per_row_bytes // 8) * 8)
    tile = min(tile, ((n + 7) // 8) * 8, 4096)        # no point exceeding (padded) batch
    return int(tile)


@functools.partial(jax.jit, static_argnames=("margin", "use_pallas", "vmem_budget_bytes"))
def contrastive_loss(out1, out2, target, margin=1.0, *, use_pallas=None,
                     vmem_budget_bytes=12 * 1024 * 1024):
    n, d = out1.shape

    # Tiny problems: pallas_call fixed overhead dominates; let XLA fuse it.
    if use_pallas is None:
        use_pallas = (n * d) >= 16384
    if not use_pallas:
        return contrastive_loss_ref(out1, out2, target, margin)

    target2d = jnp.asarray(target, jnp.float32).reshape(n, 1)
    tile_n = _choose_tile_n(n, d, jnp.dtype(out1.dtype).itemsize, vmem_budget_bytes)
    grid = (pl.cdiv(n, tile_n),)

    kernel = _make_kernel(n, tile_n, float(margin), 1.0 / float(n))

    result = pl.pallas_call(
        kernel,
        out_shape=jax.ShapeDtypeStruct((1, 1), jnp.float32),
        grid=grid,
        in_specs=[
            pl.BlockSpec((tile_n, d), lambda i: (i, 0),
                         memory_space=pltpu.MemorySpace.VMEM),
            pl.BlockSpec((tile_n, d), lambda i: (i, 0),
                         memory_space=pltpu.MemorySpace.VMEM),
            pl.BlockSpec((tile_n, 1), lambda i: (i, 0),
                         memory_space=pltpu.MemorySpace.VMEM),
        ],
        # Same block every step -> VMEM-resident accumulator; batch axis carries it.
        out_specs=pl.BlockSpec((1, 1), lambda i: (0, 0),
                               memory_space=pltpu.MemorySpace.VMEM),
        compiler_params=pltpu.CompilerParams(
            dimension_semantics=("arbitrary",)),
    )(out1, out2, target2d)
    return result[0, 0]


def contrastive_loss_ref(out1, out2, target, margin=1.0):
    # Pure-JAX reference mirroring the PyTorch module exactly.
    diff = out1.astype(jnp.float32) - out2.astype(jnp.float32) + EPS
    dist = jnp.sqrt(jnp.sum(diff * diff, axis=-1))
    target = jnp.asarray(target, jnp.float32)
    hinge = jnp.maximum(margin - dist, 0.0)
    return jnp.mean((1.0 - target) * dist**2 + target * hinge**2)


if __name__ == "__main__":
    key = jax.random.PRNGKey(0)
    k1, k2, k3 = jax.random.split(key, 3)

    N, D = 8, 32  # batch of 8 embedding pairs, hidden dim 32
    out1 = jax.random.normal(k1, (N, D), dtype=jnp.float32)
    out2 = jax.random.normal(k2, (N, D), dtype=jnp.float32)
    target = jax.random.bernoulli(k3, 0.5, (N,)).astype(jnp.float32)

    # Force the Pallas path so the kernel itself is exercised even at toy size.
    loss = contrastive_loss(out1, out2, target, use_pallas=True)
    jax.block_until_ready(loss)

    ref = contrastive_loss_ref(out1, out2, target)
    assert jnp.allclose(loss, ref, rtol=1e-5, atol=1e-5), (loss, ref)

    print("KERNEL_OK")
</pallas_src>

<mosaic_0001>
module attributes {stable_mosaic.version = 11 : i64} {
  func.func @kernel(%arg0: i32, %arg1: memref<8x32xf32, #tpu.memory_space<vmem>>, %arg2: memref<8x32xf32, #tpu.memory_space<vmem>>, %arg3: memref<8x1xf32, #tpu.memory_space<vmem>>, %arg4: memref<1x1xf32, #tpu.memory_space<vmem>>) attributes {dimension_semantics = [#tpu.dimension_semantics<arbitrary>], iteration_bounds = array<i64: 1>, scalar_prefetch = 0 : i64, scratch_operands = 0 : i64, tpu.core_type = #tpu.core_type<tc>, window_params = [{transform_indices = @transform_0, window_bounds = array<i64: 8, 32>}, {transform_indices = @transform_1, window_bounds = array<i64: 8, 32>}, {transform_indices = @transform_2, window_bounds = array<i64: 8, 1>}, {pipeline_mode = #tpu.pipeline_mode<synchronous>, transform_indices = @transform_3, window_bounds = array<i64: 1, 1>}]} {
    %c0_i32 = arith.constant 0 : i32
    %0 = arith.cmpi eq, %arg0, %c0_i32 : i32
    %1 = arith.extui %0 : i1 to i32
    %c0_i32_0 = arith.constant 0 : i32
    %2 = arith.cmpi ne, %1, %c0_i32_0 : i32
    scf.if %2 {
      %cst_16 = arith.constant 0.000000e+00 : f32
      %32 = vector.broadcast %cst_16 : f32 to vector<1x1xf32>
      %c0_17 = arith.constant 0 : index
      %c0_18 = arith.constant 0 : index
      %33 = vector.load %arg4[%c0_17, %c0_18] : memref<1x1xf32, #tpu.memory_space<vmem>>, vector<1x1xf32>
      tpu.vector_store %arg4[%c0_17, %c0_18], %32 {strides = array<i32>} : memref<1x1xf32, #tpu.memory_space<vmem>>, vector<1x1xf32>,
    } else {
    }
    %c0 = arith.constant 0 : index
    %c0_1 = arith.constant 0 : index
    %3 = vector.load %arg1[%c0, %c0_1] : memref<8x32xf32, #tpu.memory_space<vmem>>, vector<8x32xf32>
    %c0_2 = arith.constant 0 : index
    %c0_3 = arith.constant 0 : index
    %4 = vector.load %arg2[%c0_2, %c0_3] : memref<8x32xf32, #tpu.memory_space<vmem>>, vector<8x32xf32>
    %c0_4 = arith.constant 0 : index
    %c0_5 = arith.constant 0 : index
    %5 = vector.load %arg3[%c0_4, %c0_5] : memref<8x1xf32, #tpu.memory_space<vmem>>, vector<8x1xf32>
    %6 = arith.subf %3, %4 : vector<8x32xf32>
    %cst = arith.constant 9.99999997E-7 : f32
    %7 = vector.broadcast %cst : f32 to vector<8x32xf32>
    %8 = arith.addf %6, %7 : vector<8x32xf32>
    %9 = arith.mulf %8, %8 : vector<8x32xf32>
    %cst_6 = arith.constant dense<0.000000e+00> : vector<8xf32>
    %10 = vector.multi_reduction <add>, %9, %cst_6 [1] : vector<8x32xf32> to vector<8xf32>
    %11 = vector.shape_cast %10 : vector<8xf32> to vector<8x1xf32>
    %12 = math.sqrt %11 : vector<8x1xf32>
    %cst_7 = arith.constant 1.000000e+00 : f32
    %13 = vector.broadcast %cst_7 : f32 to vector<8x1xf32>
    %14 = arith.subf %13, %12 : vector<8x1xf32>
    %cst_8 = arith.constant 0.000000e+00 : f32
    %15 = vector.broadcast %cst_8 : f32 to vector<8x1xf32>
    %16 = arith.maximumf %14, %15 : vector<8x1xf32>
    %17 = arith.mulf %16, %16 : vector<8x1xf32>
    %18 = arith.subf %17, %11 : vector<8x1xf32>
    %19 = arith.mulf %5, %18 : vector<8x1xf32>
    %20 = arith.addf %11, %19 : vector<8x1xf32>
    %c0_9 = arith.constant 0 : index
    %c0_10 = arith.constant 0 : index
    %21 = vector.load %arg4[%c0_9, %c0_10] : memref<1x1xf32, #tpu.memory_space<vmem>>, vector<1x1xf32>
    %22 = vector.shape_cast %20 : vector<8x1xf32> to vector<1x8x1xf32>
    %cst_11 = arith.constant dense<0.000000e+00> : vector<1xf32>
    %23 = vector.multi_reduction <add>, %22, %cst_11 [1, 2] : vector<1x8x1xf32> to vector<1xf32>
    %24 = vector.shape_cast %23 : vector<1xf32> to vector<1x1x1xf32>
    %25 = vector.extract %24[0, 0, 0] : f32 from vector<1x1x1xf32>
    %26 = vector.broadcast %25 : f32 to vector<1x1xf32>
    %27 = arith.addf %21, %26 : vector<1x1xf32>
    %c0_12 = arith.constant 0 : index
    %c0_13 = arith.constant 0 : index
    %28 = vector.load %arg4[%c0_12, %c0_13] : memref<1x1xf32, #tpu.memory_space<vmem>>, vector<1x1xf32>
    tpu.vector_store %arg4[%c0_12, %c0_13], %27 {strides = array<i32>} : memref<1x1xf32, #tpu.memory_space<vmem>>, vector<1x1xf32>,
    %c0_i32_14 = arith.constant 0 : i32
    %29 = arith.cmpi eq, %arg0, %c0_i32_14 : i32
    %30 = arith.extui %29 : i1 to i32
    %c0_i32_15 = arith.constant 0 : i32
    %31 = arith.cmpi ne, %30, %c0_i32_15 : i32
    scf.if %31 {
      %c0_16 = arith.constant 0 : index
      %c0_17 = arith.constant 0 : index
      %32 = vector.load %arg4[%c0_16, %c0_17] : memref<1x1xf32, #tpu.memory_space<vmem>>, vector<1x1xf32>
      %cst_18 = arith.constant 1.250000e-01 : f32
      %33 = vector.broadcast %cst_18 : f32 to vector<1x1xf32>
      %34 = arith.mulf %32, %33 : vector<1x1xf32>
      %c0_19 = arith.constant 0 : index
      %c0_20 = arith.constant 0 : index
      %35 = vector.load %arg4[%c0_19, %c0_20] : memref<1x1xf32, #tpu.memory_space<vmem>>, vector<1x1xf32>
      tpu.vector_store %arg4[%c0_19, %c0_20], %34 {strides = array<i32>} : memref<1x1xf32, #tpu.memory_space<vmem>>, vector<1x1xf32>,
    } else {
    }
    return
  }
  func.func @transform_0(%arg0: i32) -> (i32, i32) {
    %c0_i32 = arith.constant 0 : i32
    %c0_i32_0 = arith.constant 0 : i32
    return %arg0, %c0_i32 : i32, i32
  }
  func.func @transform_1(%arg0: i32) -> (i32, i32) {
    %c0_i32 = arith.constant 0 : i32
    %c0_i32_0 = arith.constant 0 : i32
    return %arg0, %c0_i32 : i32, i32
  }
  func.func @transform_2(%arg0: i32) -> (i32, i32) {
    %c0_i32 = arith.constant 0 : i32
    %c0_i32_0 = arith.constant 0 : i32
    return %arg0, %c0_i32 : i32, i32
  }
  func.func @transform_3(%arg0: i32) -> (i32, i32) {
    %c0_i32 = arith.constant 0 : i32
    %c0_i32_0 = arith.constant 0 : i32
    %c0_i32_1 = arith.constant 0 : i32
    return %c0_i32, %c0_i32_0 : i32, i32
  }
}

</mosaic_0001>

<llo_original>
// kernel: contrastive_loss.1
$region0: #{contrastive_loss.1}
  #allocation0 [shape = 'u32[]', space=smem, size = 0x4, offset = 0x4, fixed_abs, tag = 'smem constant byte address 0x4 - core index']
  #allocation1 [shape = 'u32[72,128]{1,0:T(1,128)}', space=vmem, size = 0x9000, scoped, tag = 'internal scratch']
  %s0 = inlined_call_operand.vmem [shape: f32[8,32], index: 0, kind: input, shape index: {}]
  %s1 = inlined_call_operand.hbm [shape: f32[8,32], index: 1, kind: input, shape index: {}]
  %s2 = inlined_call_operand.vmem [shape: f32[8,1], index: 2, kind: input, shape index: {}]
  %s3 = inlined_call_operand.hbm [shape: f32[1,1], index: 3, kind: output, shape index: {}]
  %s4 = sld [smem:[#allocation0]]
  $region34: #{contrastive_loss.1} parent=0
    _
  %s6 = ssub.s32 1, %s4
  %s7 = scalar_select 0, %s6, %s4
  $region1: #{contrastive_loss.1} parent=0
    #allocation2 [shape = 'u8[4096]{0}', space=vmem, size = 0x1000, scoped, tag = 'input window, operand 1, single buffered']
    #allocation3 [shape = 's32[1]{0}', space=sflag, size = 0x4, scoped, tag = 'scoped memory for contrastive_loss.1']
    #allocation4 [shape = 's32[1]{0}', space=sflag, size = 0x4, scoped, tag = 'scoped memory for contrastive_loss.1']
    #allocation5 [shape = 'u8[512]{0}', space=vmem, size = 0x400, scoped, tag = 'output window, operand 0, single buffered']
    %8 = vsyncpa [#allocation3], 0
    %9 = vsyncpa [#allocation4], 0
    // Predicated region
    $region2: #{contrastive_loss.1} parent=1 // pred_check
      _
    $region3: #{contrastive_loss.1} parent=1 // pred_check_branch
      %11 = sbr.rel (0) target = $region5
    $region4: #{contrastive_loss.1} parent=1 // pred_region
      _
    $region5: #{contrastive_loss.1} parent=1 // pred_fallthru
      _
    // Predicated region
    $region6: #{contrastive_loss.1} parent=1 // pred_check
      _
    $region7: #{contrastive_loss.1} parent=1 // pred_check_branch
      %13 = sbr.rel (0) target = $region9
    $region8: #{contrastive_loss.1} parent=1 // pred_region
      %15 = vsyncadd [#allocation3], 0
      %s17 = sshll.u32 %s1, 4
      %s18 = int_to_ptr.hbm [resolvable:$true] %s17
      %s19 = sshll.u32 [#allocation2], 4
      %s20 = int_to_ptr.vmem [resolvable:$true] %s19
      %22 = dma.hbm_to_vmem [thread:$0]  %s18, 128, %s20, [#allocation3]
    $region9: #{contrastive_loss.1} parent=1 // pred_fallthru
      _
    // Predicated region
    $region10: #{contrastive_loss.1} parent=1 // pred_check
      _
    $region11: #{contrastive_loss.1} parent=1 // pred_check_branch
      %24 = sbr.rel (0) target = $region13
    $region12: #{contrastive_loss.1} parent=1 // pred_region
      _
    $region13: #{contrastive_loss.1} parent=1 // pred_fallthru
      _
    // Predicated region
    $region14: #{contrastive_loss.1} parent=1 // pred_check
      _
    $region15: #{contrastive_loss.1} parent=1 // pred_check_branch
      %26 = sbr.rel (0) target = $region17
    $region16: #{contrastive_loss.1} parent=1 // pred_region
      %28 = dma.done [#allocation3], 128
    $region17: #{contrastive_loss.1} parent=1 // pred_fallthru
      _
    %p29 = scmp.eq.s32.totalorder 0, 0
    // Predicated region
    $region18: #{contrastive_loss.1} parent=1 // pred_check
      %p30 = pneg %p29
    $region19: #{contrastive_loss.1} parent=1 // pred_check_branch
      %32 = sbr.rel (%p30) target = $region21
    $region20: #{contrastive_loss.1} parent=1 // pred_region
      %vm33 = vcmask 0
      %34 = vst.msk [vmem:[#allocation5] sm:$0x1] %vm33, 0.0
    $region21: #{contrastive_loss.1} parent=1 // pred_fallthru
      _
    %v35 = vld [vmem:[%s0] sm:$0xff]
    %v36 = vld [vmem:[#allocation2] sm:$0xff]
    %v37 = vld [vmem:[%s2] sm:$0xff]
    %v38 = vsub.f32 %v35, %v36
    %v39 = vadd.f32 %v38, 1e-06
    %v40 = vmul.f32 %v39, %v39
    %vm41 = vcmask 261120
    %v42 = vsel %vm41, %v40, 0.0
    %43 = vadd.xlane.f32.xlu0 %v42
    %v44 = vpop.xlane.xlu0 %43
    %v45 = vrsqrt.pop %v44
    %v46 = vmul.f32 %v45, %v44
    %v47 = vmul.f32 %v46, %v45
    %v48 = vmul.f32 0.5, %v47
    %v49 = vsub.f32 1.5, %v48
    %v50 = vmul.f32 %v45, %v49
    %v51 = vmul.f32 %v44, %v50
    %vm52 = vcmp.eq.f32.partialorder %v44, inf
    %v53 = vsel %vm52, %v44, %v51
    %vm54 = vcmp.eq.f32.partialorder %v44, 0.0
    %v55 = vand.u32 %v44, 2147483648
    %v56 = vsel %vm54, %v55, %v53
    %v57 = vsub.f32 1.0, %v56
    %v58 = vmax.f32 %v57, 0.0
    %v59 = vmul.f32 %v58, %v58
    %v60 = vsub.f32 %v59, %v44
    %v61 = vmul.f32 %v37, %v60
    %v62 = vadd.f32 %v44, %v61
    %v63 = vld [vmem:[#allocation5] sm:$0x1]
    %vm64 = vcmask 7168
    %v65 = vsel %vm64, %v62, 0.0
    %66 = vadd.xlane.f32.xlu0 %v65
    %v67 = vpop.xlane.xlu0 %66
    %v68 = vrot.slane %v67, 4
    %v69 = vadd.f32 %v67, %v68
    %v70 = vrot.slane %v69, 2
    %v71 = vadd.f32 %v69, %v70
    %v72 = vrot.slane %v71, 1
    %v73 = vadd.f32 %v71, %v72
    %s74 = vtos %v73
    %v75 = vstv %s74
    %v76 = vadd.f32 %v63, %v75
    %vm77 = vcmask 0
    %78 = vst.msk [vmem:[#allocation5] sm:$0x1] %vm77, %v76
    // Predicated region
    $region22: #{contrastive_loss.1} parent=1 // pred_check
      %p79 = pneg %p29
    $region23: #{contrastive_loss.1} parent=1 // pred_check_branch
      %81 = sbr.rel (%p79) target = $region25
    $region24: #{contrastive_loss.1} parent=1 // pred_region
      %v82 = vld [vmem:[#allocation5] sm:$0x1]
      %v83 = vmul.f32 %v82, 0.125
      %84 = vst.msk [vmem:[#allocation5] sm:$0x1] %vm77, %v83
    $region25: #{contrastive_loss.1} parent=1 // pred_fallthru
      _
    // Predicated region
    $region26: #{contrastive_loss.1} parent=1 // pred_check
      _
    $region27: #{contrastive_loss.1} parent=1 // pred_check_branch
      %86 = sbr.rel (0) target = $region29
    $region28: #{contrastive_loss.1} parent=1 // pred_region
      %88 = vsyncadd [#allocation4], 0
      %s90 = sshll.u32 [#allocation5], 4
      %s91 = int_to_ptr.vmem [resolvable:$true] %s90
      %s92 = sshll.u32 %s3, 4
      %s93 = int_to_ptr.hbm [resolvable:$true] %s92
      %95 = dma.vmem_to_hbm [thread:$0]  %s91, 16, %s93, [#allocation4]
    $region29: #{contrastive_loss.1} parent=1 // pred_fallthru
      _
    // Predicated region
    $region30: #{contrastive_loss.1} parent=1 // pred_check
      _
    $region31: #{contrastive_loss.1} parent=1 // pred_check_branch
      %97 = sbr.rel (0) target = $region33
    $region32: #{contrastive_loss.1} parent=1 // pred_region
      %99 = dma.done [#allocation4], 16
    $region33: #{contrastive_loss.1} parent=1 // pred_fallthru
      _
    %100 = vsyncpa [#allocation3], 1
    %101 = vsyncpa [#allocation4], 1

</llo_original>
